<compile_context>
chip_gen: v5e
topology: v5e:2x2
jax: 0.10.0
libtpu: 0.0.40
codegen_flags: <defaults>
</compile_context>

<pallas_src>
import functools
import math

import jax
import jax.numpy as jnp
from jax.experimental import pallas as pl
from jax.experimental.pallas import tpu as pltpu


def brush_stroke_kernel(minv_ref, src_ref, out_ref, *, H, W, TILE_N):
    shift = int(math.log2(W))            # W is a power of two (asserted in wrapper)
    b = pl.program_id(0)                 # stroke index
    j = pl.program_id(1)                 # dst-column tile index

    # ---- dst pixel coordinates for this tile: (1, TILE_N) ----
    p = jax.lax.broadcasted_iota(jnp.int32, (1, TILE_N), 1) + j * TILE_N
    x_d = (p & (W - 1)).astype(jnp.float32)
    y_d = (p >> shift).astype(jnp.float32)

    # ---- inverse-affine source coordinates (align_corners=True pixels) ----
    m00 = minv_ref[b, 0]; m01 = minv_ref[b, 1]; m02 = minv_ref[b, 2]
    m10 = minv_ref[b, 3]; m11 = minv_ref[b, 4]; m12 = minv_ref[b, 5]

    xs = m00 * x_d + m01 * y_d + m02                          # (1, TILE_N)
    ys = m10 * x_d + m11 * y_d + m12
    x0f = jnp.floor(xs); y0f = jnp.floor(ys)
    fx = xs - x0f;       fy = ys - y0f
    x0 = x0f.astype(jnp.int32); y0 = y0f.astype(jnp.int32)

    zero = jnp.zeros((), jnp.float32)

    # ---- separable bilinear weights ----
    # wx[x, n]: weight of src column x toward dst pixel n  -> (W, TILE_N)
    xq = jax.lax.broadcasted_iota(jnp.int32, (W, 1), 0)
    wx = jnp.where(xq == x0, 1.0 - fx, jnp.where(xq == x0 + 1, fx, zero))
    # wy[y, n]: weight of src row y toward dst pixel n      -> (H, TILE_N)
    yq = jax.lax.broadcasted_iota(jnp.int32, (H, 1), 0)
    wy = jnp.where(yq == y0, 1.0 - fy, jnp.where(yq == y0 + 1, fy, zero))
    # Out-of-range x0/x1 (or y0/y1) match no src coordinate on that axis, so
    # the separable product reproduces grid_sample(padding_mode='zeros').

    # ---- warp: (H, W) @ (W, TILE_N) on the MXU, then reduce over rows ----
    src = src_ref[0]                                          # (H, W) f32
    tmp = jnp.dot(src, wx, preferred_element_type=jnp.float32)  # (H, TILE_N)
    warped = jnp.sum(wy * tmp, axis=0, keepdims=True)           # (1, TILE_N)

    # ---- special_sigmoid (FRIDA): 1/(1+exp(-((2x-1)+0.2)/0.05)) ----
    z = ((warped * 2.0 - 1.0) + 0.2) / 0.05
    sig = 1.0 / (1.0 + jnp.exp(-z))

    out_ref[0] = sig                                          # alpha channel only


def _pick_tile_n(hw):
    # Lane-dense dst tile; with the separable form the VMEM footprint per tile
    # is O((H + W) * TILE_N) floats, so 1024 fits comfortably on v5e/v6e/v7x.
    if hw <= 1024:
        return hw
    for t in (1024, 512, 256, 128):
        if hw % t == 0:
            return t
    return hw


def brush_stroke_forward(full_param, w_p2i, b_p2i, minv, color, h, w,
                         tile_n=None):
    """full_param (B,4), w_p2i (4,HW), b_p2i (1,HW), minv (B,8) f32 (rows of the
    inverse rigid-body matrix, cols 6,7 unused padding), color (B,3)
    -> output (B,4,h,w), one NCHW image per stroke (rows 0..2 color, row 3 alpha)."""
    assert (w & (w - 1)) == 0, "W must be a power of two for the shift/mask path"
    B = full_param.shape[0]
    HW = h * w
    if tile_n is None:
        tile_n = _pick_tile_n(HW)
    assert HW % tile_n == 0
    n_tiles = HW // tile_n

    # param2img hoisted out of the kernel: one XLA GEMM + sigmoid per call.
    src = jax.nn.sigmoid(
        full_param.astype(jnp.float32) @ w_p2i.astype(jnp.float32)
        + b_p2i.astype(jnp.float32))                          # (B, HW)
    src = src.reshape(B, h, w)

    alpha = pl.pallas_call(
        functools.partial(brush_stroke_kernel, H=h, W=w, TILE_N=tile_n),
        grid=(B, n_tiles),
        out_shape=jax.ShapeDtypeStruct((B, 1, HW), jnp.float32),
        in_specs=[
            pl.BlockSpec(memory_space=pltpu.MemorySpace.SMEM),     # minv (B,8)
            pl.BlockSpec((1, h, w), lambda b, j: (b, 0, 0)),       # src image
        ],
        out_specs=pl.BlockSpec((1, 1, tile_n), lambda b, j: (b, 0, j)),
        compiler_params=pltpu.CompilerParams(
            dimension_semantics=("parallel", "parallel")),
    )(minv.astype(jnp.float32), src)

    alpha = alpha.reshape(B, 1, h, w)
    color_img = jnp.broadcast_to(
        color.reshape(B, 3, 1, 1).astype(jnp.float32), (B, 3, h, w))
    return jnp.concatenate([color_img, alpha], axis=1)        # (B, 4, h, w) NCHW


def rigid_body_matrix(a, xt, yt, anchor_x, anchor_y):
    # Mirrors rigid_body_transform(): a is negated, xt/yt already in pixels.
    a = -1.0 * a
    c, s = jnp.cos(a), jnp.sin(a)
    row0 = jnp.stack([c, -s, anchor_x - anchor_x * c + anchor_y * s + xt])
    row1 = jnp.stack([s, c, anchor_y - anchor_x * s - anchor_y * c + yt])
    row2 = jnp.array([0.0, 0.0, 1.0], jnp.float32)
    return jnp.stack([row0, row1, row2]).astype(jnp.float32)


if __name__ == "__main__":
    # --- opt hyper-params (typical FRIDA values) ---
    MAX_STROKE_LENGTH = 0.05
    MIN_STROKE_LENGTH = 0.01
    MIN_STROKE_Z = 0.1
    MAX_ALPHA = 1.0
    MAX_BEND = 0.02

    B = 2                        # strokes rendered per call (batched grid axis)
    h = w = 16
    HW = h * w

    key = jax.random.PRNGKey(0)
    ks = jax.random.split(key, 10)

    # --- deterministic BrushStroke.__init__ parameters, one row per stroke ---
    color = jax.random.uniform(ks[0], (B, 3), jnp.float32) * 0.4 + 0.3
    a = (jax.random.uniform(ks[1], (B,), jnp.float32) * 2.0 - 1.0) * 3.14
    xt = jax.random.uniform(ks[2], (B,), jnp.float32) * 2.0 - 1.0
    yt = jax.random.uniform(ks[3], (B,), jnp.float32) * 2.0 - 1.0
    stroke_length = jax.random.uniform(ks[4], (B,), jnp.float32) * MAX_STROKE_LENGTH
    stroke_z = jnp.clip(jax.random.uniform(ks[5], (B,), jnp.float32),
                        MIN_STROKE_Z, 0.95)
    stroke_alpha = (jax.random.uniform(ks[6], (B,), jnp.float32) * 2.0 - 1.0) * MAX_ALPHA
    stroke_bend = (jax.random.uniform(ks[7], (B,), jnp.float32) * 2.0 - 1.0) * MAX_BEND
    stroke_bend = jnp.where(stroke_bend > 0,
                            jnp.minimum(stroke_bend, stroke_length),
                            jnp.maximum(stroke_bend, -stroke_length))

    # full_param = cat([length, bend, z, alpha]).unsqueeze(0), one row per stroke
    full_param = jnp.stack([stroke_length, stroke_bend, stroke_z, stroke_alpha],
                           axis=1).astype(jnp.float32)        # (B, 4)

    # --- synthetic deterministic param2img: linear render to (h, w) ---
    w_p2i = jax.random.normal(ks[8], (4, HW), jnp.float32) * 0.5
    b_p2i = jax.random.normal(ks[9], (1, HW), jnp.float32) * 0.1

    # --- rigid body transforms: per-stroke src->dst pixel matrix, pass inverse ---
    anchor_x, anchor_y = w / 2.0, h / 2.0
    Ms = jax.vmap(lambda aa, xx, yy: rigid_body_matrix(
        aa, xx * (w / 2.0), yy * (h / 2.0), anchor_x, anchor_y))(a, xt, yt)
    Minv = jnp.linalg.inv(Ms)                                  # (B, 3, 3)
    minv = jnp.concatenate(
        [Minv[:, 0, :3], Minv[:, 1, :3], jnp.zeros((B, 2), jnp.float32)],
        axis=1).astype(jnp.float32)                            # (B, 8)

    out = brush_stroke_forward(full_param, w_p2i, b_p2i, minv, color, h, w)
    out = jax.block_until_ready(out)

    assert out.shape == (B, 4, h, w) and out.dtype == jnp.float32
    assert bool(jnp.all(jnp.isfinite(out)))
    print("KERNEL_OK")
</pallas_src>

<mosaic_0001>
module attributes {stable_mosaic.version = 11 : i64} {
  func.func @brush_stroke_kernel(%arg0: i32, %arg1: i32, %arg2: memref<2x8xf32, #tpu.memory_space<smem>>, %arg3: memref<1x16x16xf32, #tpu.memory_space<vmem>>, %arg4: memref<1x1x256xf32, #tpu.memory_space<vmem>>) attributes {dimension_semantics = [#tpu.dimension_semantics<parallel>, #tpu.dimension_semantics<parallel>], iteration_bounds = array<i64: 2, 1>, scalar_prefetch = 0 : i64, scratch_operands = 0 : i64, tpu.core_type = #tpu.core_type<tc>, window_params = [{transform_indices = @transform_0, window_bounds = array<i64: 2, 8>}, {transform_indices = @transform_1, window_bounds = array<i64: 1, 16, 16>}, {transform_indices = @transform_2, window_bounds = array<i64: 1, 1, 256>}]} {
    %0 = tpu.iota {dimensions = array<i32: 1>} : vector<1x256xi32>
    %c256_i32 = arith.constant 256 : i32
    %1 = arith.muli %arg1, %c256_i32 : i32
    %2 = vector.broadcast %1 : i32 to vector<1x256xi32>
    %3 = arith.addi %0, %2 : vector<1x256xi32>
    %c15_i32 = arith.constant 15 : i32
    %4 = vector.broadcast %c15_i32 : i32 to vector<1x256xi32>
    %5 = arith.andi %3, %4 : vector<1x256xi32>
    %6 = arith.sitofp %5 : vector<1x256xi32> to vector<1x256xf32>
    %c4_i32 = arith.constant 4 : i32
    %7 = vector.broadcast %c4_i32 : i32 to vector<1x256xi32>
    %8 = arith.shrsi %3, %7 : vector<1x256xi32>
    %9 = arith.sitofp %8 : vector<1x256xi32> to vector<1x256xf32>
    %10 = arith.index_cast %arg0 : i32 to index
    %c0 = arith.constant 0 : index
    %11 = memref.load %arg2[%10, %c0] : memref<2x8xf32, #tpu.memory_space<smem>>
    %12 = arith.index_cast %arg0 : i32 to index
    %c1 = arith.constant 1 : index
    %13 = memref.load %arg2[%12, %c1] : memref<2x8xf32, #tpu.memory_space<smem>>
    %14 = arith.index_cast %arg0 : i32 to index
    %c2 = arith.constant 2 : index
    %15 = memref.load %arg2[%14, %c2] : memref<2x8xf32, #tpu.memory_space<smem>>
    %16 = arith.index_cast %arg0 : i32 to index
    %c3 = arith.constant 3 : index
    %17 = memref.load %arg2[%16, %c3] : memref<2x8xf32, #tpu.memory_space<smem>>
    %18 = arith.index_cast %arg0 : i32 to index
    %c4 = arith.constant 4 : index
    %19 = memref.load %arg2[%18, %c4] : memref<2x8xf32, #tpu.memory_space<smem>>
    %20 = arith.index_cast %arg0 : i32 to index
    %c5 = arith.constant 5 : index
    %21 = memref.load %arg2[%20, %c5] : memref<2x8xf32, #tpu.memory_space<smem>>
    %22 = vector.broadcast %11 : f32 to vector<1x256xf32>
    %23 = arith.mulf %22, %6 : vector<1x256xf32>
    %24 = vector.broadcast %13 : f32 to vector<1x256xf32>
    %25 = arith.mulf %24, %9 : vector<1x256xf32>
    %26 = arith.addf %23, %25 : vector<1x256xf32>
    %27 = vector.broadcast %15 : f32 to vector<1x256xf32>
    %28 = arith.addf %26, %27 : vector<1x256xf32>
    %29 = vector.broadcast %17 : f32 to vector<1x256xf32>
    %30 = arith.mulf %29, %6 : vector<1x256xf32>
    %31 = vector.broadcast %19 : f32 to vector<1x256xf32>
    %32 = arith.mulf %31, %9 : vector<1x256xf32>
    %33 = arith.addf %30, %32 : vector<1x256xf32>
    %34 = vector.broadcast %21 : f32 to vector<1x256xf32>
    %35 = arith.addf %33, %34 : vector<1x256xf32>
    %36 = math.floor %28 : vector<1x256xf32>
    %37 = math.floor %35 : vector<1x256xf32>
    %38 = arith.subf %28, %36 : vector<1x256xf32>
    %39 = arith.subf %35, %37 : vector<1x256xf32>
    %40 = arith.fptosi %36 : vector<1x256xf32> to vector<1x256xi32>
    %41 = arith.fptosi %37 : vector<1x256xf32> to vector<1x256xi32>
    %42 = tpu.iota {dimensions = array<i32: 0>} : vector<16x1xi32>
    %43 = vector.broadcast %42 : vector<16x1xi32> to vector<16x256xi32>
    %44 = vector.broadcast %40 : vector<1x256xi32> to vector<16x256xi32>
    %45 = arith.cmpi eq, %43, %44 : vector<16x256xi32>
    %cst = arith.constant 1.000000e+00 : f32
    %46 = vector.broadcast %cst : f32 to vector<1x256xf32>
    %47 = arith.subf %46, %38 : vector<1x256xf32>
    %c1_i32 = arith.constant 1 : i32
    %48 = vector.broadcast %c1_i32 : i32 to vector<1x256xi32>
    %49 = arith.addi %40, %48 : vector<1x256xi32>
    %50 = vector.broadcast %42 : vector<16x1xi32> to vector<16x256xi32>
    %51 = vector.broadcast %49 : vector<1x256xi32> to vector<16x256xi32>
    %52 = arith.cmpi eq, %50, %51 : vector<16x256xi32>
    %cst_0 = arith.constant 0.000000e+00 : f32
    %53 = vector.shape_cast %38 : vector<1x256xf32> to vector<1x256xf32>
    %54 = vector.broadcast %53 : vector<1x256xf32> to vector<16x256xf32>
    %55 = vector.broadcast %cst_0 : f32 to vector<16x256xf32>
    %56 = arith.select %52, %54, %55 : vector<16x256xi1>, vector<16x256xf32>
    %57 = vector.shape_cast %47 : vector<1x256xf32> to vector<1x256xf32>
    %58 = vector.broadcast %57 : vector<1x256xf32> to vector<16x256xf32>
    %59 = arith.select %45, %58, %56 : vector<16x256xi1>, vector<16x256xf32>
    %60 = tpu.iota {dimensions = array<i32: 0>} : vector<16x1xi32>
    %61 = vector.broadcast %60 : vector<16x1xi32> to vector<16x256xi32>
    %62 = vector.broadcast %41 : vector<1x256xi32> to vector<16x256xi32>
    %63 = arith.cmpi eq, %61, %62 : vector<16x256xi32>
    %cst_1 = arith.constant 1.000000e+00 : f32
    %64 = vector.broadcast %cst_1 : f32 to vector<1x256xf32>
    %65 = arith.subf %64, %39 : vector<1x256xf32>
    %c1_i32_2 = arith.constant 1 : i32
    %66 = vector.broadcast %c1_i32_2 : i32 to vector<1x256xi32>
    %67 = arith.addi %41, %66 : vector<1x256xi32>
    %68 = vector.broadcast %60 : vector<16x1xi32> to vector<16x256xi32>
    %69 = vector.broadcast %67 : vector<1x256xi32> to vector<16x256xi32>
    %70 = arith.cmpi eq, %68, %69 : vector<16x256xi32>
    %cst_3 = arith.constant 0.000000e+00 : f32
    %71 = vector.shape_cast %39 : vector<1x256xf32> to vector<1x256xf32>
    %72 = vector.broadcast %71 : vector<1x256xf32> to vector<16x256xf32>
    %73 = vector.broadcast %cst_3 : f32 to vector<16x256xf32>
    %74 = arith.select %70, %72, %73 : vector<16x256xi1>, vector<16x256xf32>
    %75 = vector.shape_cast %65 : vector<1x256xf32> to vector<1x256xf32>
    %76 = vector.broadcast %75 : vector<1x256xf32> to vector<16x256xf32>
    %77 = arith.select %63, %76, %74 : vector<16x256xi1>, vector<16x256xf32>
    %c0_4 = arith.constant 0 : index
    %c0_5 = arith.constant 0 : index
    %c0_6 = arith.constant 0 : index
    %78 = vector.load %arg3[%c0_4, %c0_5, %c0_6] : memref<1x16x16xf32, #tpu.memory_space<vmem>>, vector<1x16x16xf32>
    %79 = vector.shape_cast %78 : vector<1x16x16xf32> to vector<16x16xf32>
    %cst_7 = arith.constant dense<0.000000e+00> : vector<16x256xf32>
    %80 = tpu.matmul %79, %59, %cst_7 {dimension_numbers = #tpu.dot_dimension_numbers<[1], [0], [0], [1], [0, 0, 1, 1], [], []>} : vector<16x16xf32>, vector<16x256xf32>, vector<16x256xf32> -> vector<16x256xf32>
    %81 = arith.mulf %77, %80 : vector<16x256xf32>
    %cst_8 = arith.constant dense<0.000000e+00> : vector<256xf32>
    %82 = vector.multi_reduction <add>, %81, %cst_8 [0] : vector<16x256xf32> to vector<256xf32>
    %83 = vector.shape_cast %82 : vector<256xf32> to vector<1x256xf32>
    %cst_9 = arith.constant 2.000000e+00 : f32
    %84 = vector.broadcast %cst_9 : f32 to vector<1x256xf32>
    %85 = arith.mulf %83, %84 : vector<1x256xf32>
    %cst_10 = arith.constant 1.000000e+00 : f32
    %86 = vector.broadcast %cst_10 : f32 to vector<1x256xf32>
    %87 = arith.subf %85, %86 : vector<1x256xf32>
    %cst_11 = arith.constant 2.000000e-01 : f32
    %88 = vector.broadcast %cst_11 : f32 to vector<1x256xf32>
    %89 = arith.addf %87, %88 : vector<1x256xf32>
    %cst_12 = arith.constant 5.000000e-02 : f32
    %90 = vector.broadcast %cst_12 : f32 to vector<1x256xf32>
    %91 = arith.divf %89, %90 : vector<1x256xf32>
    %cst_13 = arith.constant 0.000000e+00 : f32
    %92 = vector.broadcast %cst_13 : f32 to vector<1x256xf32>
    %93 = arith.subf %92, %91 : vector<1x256xf32>
    %94 = math.exp %93 : vector<1x256xf32>
    %cst_14 = arith.constant 1.000000e+00 : f32
    %95 = vector.broadcast %cst_14 : f32 to vector<1x256xf32>
    %96 = arith.addf %95, %94 : vector<1x256xf32>
    %cst_15 = arith.constant 1.000000e+00 : f32
    %97 = vector.broadcast %cst_15 : f32 to vector<1x256xf32>
    %98 = arith.divf %97, %96 : vector<1x256xf32>
    %c0_16 = arith.constant 0 : index
    %c0_17 = arith.constant 0 : index
    %c0_18 = arith.constant 0 : index
    %99 = vector.load %arg4[%c0_16, %c0_17, %c0_18] : memref<1x1x256xf32, #tpu.memory_space<vmem>>, vector<1x1x256xf32>
    %100 = vector.shape_cast %99 : vector<1x1x256xf32> to vector<1x256xf32>
    %101 = vector.shape_cast %98 : vector<1x256xf32> to vector<1x1x256xf32>
    tpu.vector_store %arg4[%c0_16, %c0_17, %c0_18], %101 {strides = array<i32>} : memref<1x1x256xf32, #tpu.memory_space<vmem>>, vector<1x1x256xf32>,
    return
  }
  func.func @transform_0(%arg0: i32, %arg1: i32) -> (i32, i32) {
    %c0_i32 = arith.constant 0 : i32
    %c0_i32_0 = arith.constant 0 : i32
    %c0_i32_1 = arith.constant 0 : i32
    return %c0_i32, %c0_i32_0 : i32, i32
  }
  func.func @transform_1(%arg0: i32, %arg1: i32) -> (i32, i32, i32) {
    %c0_i32 = arith.constant 0 : i32
    %c0_i32_0 = arith.constant 0 : i32
    %c0_i32_1 = arith.constant 0 : i32
    return %arg0, %c0_i32, %c0_i32_0 : i32, i32, i32
  }
  func.func @transform_2(%arg0: i32, %arg1: i32) -> (i32, i32, i32) {
    %c0_i32 = arith.constant 0 : i32
    %c0_i32_0 = arith.constant 0 : i32
    return %arg0, %c0_i32, %arg1 : i32, i32, i32
  }
}

</mosaic_0001>

<llo_original>
// kernel: tpu_custom_call.1
$region0: #{tpu_custom_call.1}
  #allocation0 [shape = 'u32[]', space=smem, size = 0x4, offset = 0x4, fixed_abs, tag = 'smem constant byte address 0x4 - core index']
  #allocation1 [shape = 'u32[72,128]{1,0:T(1,128)}', space=vmem, size = 0x9000, scoped, tag = 'internal scratch']
  %s0 = inlined_call_operand.hbm [shape: f32[2,8], index: 0, kind: input, shape index: {}]
  %s1 = inlined_call_operand.hbm [shape: f32[2,16,16], index: 1, kind: input, shape index: {}]
  %s2 = inlined_call_operand.hbm [shape: f32[2,1,256], index: 2, kind: output, shape index: {}]
  %s3 = sld [smem:[#allocation0]]
  $region49: #{tpu_custom_call.1} parent=0
    _
  %s5 = ssub.s32 1, %s3
  %s6 = scalar_select 0, %s5, %s3
  $region1: #{tpu_custom_call.1} parent=0
    #allocation2 [shape = 'u8[1024]{0}', space=smem, size = 0x400, scoped, tag = 'input window, operand 0, single buffered']
    #allocation3 [shape = 's32[2]{0}', space=sflag, size = 0x8, scoped, tag = 'scoped memory for tpu_custom_call.1']
    #allocation4 [shape = 's32[2]{0}', space=sflag, size = 0x8, scoped, tag = 'scoped memory for tpu_custom_call.1']
    #allocation5 [shape = 's32[2]{0}', space=sflag, size = 0x8, scoped, tag = 'scoped memory for tpu_custom_call.1']
    #allocation6 [shape = 'u8[16384]{0}', space=vmem, size = 0x4000, scoped, tag = 'input window, operand 1']
    #allocation7 [shape = 'u8[2048]{0}', space=vmem, size = 0x800, scoped, tag = 'output window, operand 0']
    %7 = vsyncpa [#allocation5], 0
    %8 = vsyncpa [#allocation3], 0
    %s9 = scalar_lea.sflag [#allocation3], 1
    %10 = vsyncpa %s9, 0
    %11 = vsyncpa [#allocation4], 0
    %s12 = scalar_lea.sflag [#allocation4], 1
    %13 = vsyncpa %s12, 0
    loop: start=0, step=1, limit=4
    $region2: #{tpu_custom_call.1} parent=1 // loop_pre_header
      _
    $region3: #{tpu_custom_call.1} parent=1 // loop_header
      %s15 = sphi 0, %s19
      %p16 = scmp.ge.s32.totalorder %s15, 4
      %s22 = sphi 0, %s34
      %s23 = sphi 0, %s30
      %s24 = sphi 0, %s22
      %s25 = sphi 0, %s23
      %s26 = sphi 0, %s24
      %s27 = sphi 0, %s25
      %s35 = sphi 0, %s35
      %s37 = sphi 0, %s35
      %s38 = sphi 0, %s37
      %s52 = sphi 0, %s38
      %s58 = sphi 0, %s60
      %s61 = sphi 0, %s58
      %s62 = sphi 0, %s61
      %s78 = sphi 0, %s62
      %s86 = sphi 0, %s88
      %s89 = sphi 0, %s86
      %s90 = sphi 0, %s89
      %s106 = sphi 0, %s90
    $region4: #{tpu_custom_call.1} parent=1 // loop_header_branch
      %18 = sbr.rel (%p16) target = $region8
    $region5: #{tpu_custom_call.1} parent=1 // loop_body
      %s20 = ssub.s32 %s15, 1
      %s21 = ssub.s32 %s15, 2
      %s28 = sadd.s32 1, %s23
      %p29 = scmp.ge.s32.totalorder %s28, 1
      %s30 = scalar_select %p29, 0, %s28
      %s31 = sadd.s32 1, %s22
      %s32 = scalar_select %p29, %s31, %s22
      %p33 = scmp.ge.s32.totalorder %s32, 2
      %s34 = scalar_select %p33, 0, %s32
      %s36 = sadd.s32 %s35, 1
      %p39 = scmp.eq.s32.totalorder %s15, 1
      %p40 = scmp.ne.s32.totalorder %s35, %s37
      %p41 = scmp.eq.s32.totalorder %s15, 0
      %p42 = por %p40, %p41
      %p43 = scmp.ne.s32.totalorder %s35, %s37
      %p44 = scmp.eq.s32.totalorder %s20, 1
      %p45 = por %p43, %p44
      %p46 = scmp.ne.s32.totalorder %s37, %s38
      %p47 = scmp.eq.s32.totalorder %s20, 0
      %p48 = por %p46, %p47
      %p49 = scmp.ne.s32.totalorder %s37, %s38
      %p50 = scmp.eq.s32.totalorder %s21, 1
      %p51 = por %p49, %p50
      %p53 = scmp.ne.s32.totalorder %s38, %s52
      %p54 = scmp.eq.s32.totalorder %s21, 0
      %p55 = por %p53, %p54
      %s56 = ssub.s32 %s22, %s34
      %p57 = scmp.eq.s32.totalorder %s56, 0
      %s59 = sadd.s32 %s58, 1
      %s60 = scalar_select %p57, %s58, %s59
      %p63 = pneg %p57
      %p64 = scmp.eq.s32.totalorder %s15, 1
      %p65 = por %p63, %p64
      %p66 = scmp.ne.s32.totalorder %s58, %s61
      %p67 = scmp.eq.s32.totalorder %s15, 0
      %p68 = por %p66, %p67
      %p69 = scmp.ne.s32.totalorder %s58, %s61
      %p70 = scmp.eq.s32.totalorder %s20, 1
      %p71 = por %p69, %p70
      %p72 = scmp.ne.s32.totalorder %s61, %s62
      %p73 = scmp.eq.s32.totalorder %s20, 0
      %p74 = por %p72, %p73
      %p75 = scmp.ne.s32.totalorder %s61, %s62
      %p76 = scmp.eq.s32.totalorder %s21, 1
      %p77 = por %p75, %p76
      %p79 = scmp.ne.s32.totalorder %s62, %s78
      %p80 = scmp.eq.s32.totalorder %s21, 0
      %p81 = por %p79, %p80
      %s82 = ssub.s32 %s22, %s34
      %s83 = ssub.s32 %s23, %s30
      %s84 = sor.u32 %s82, %s83
      %p85 = scmp.eq.s32.totalorder %s84, 0
      %s87 = sadd.s32 %s86, 1
      %s88 = scalar_select %p85, %s86, %s87
      %p91 = pneg %p85
      %p92 = scmp.eq.s32.totalorder %s15, 1
      %p93 = por %p91, %p92
      %p94 = scmp.ne.s32.totalorder %s86, %s89
      %p95 = scmp.eq.s32.totalorder %s15, 0
      %p96 = por %p94, %p95
      %p97 = scmp.ne.s32.totalorder %s86, %s89
      %p98 = scmp.eq.s32.totalorder %s20, 1
      %p99 = por %p97, %p98
      %p100 = scmp.ne.s32.totalorder %s89, %s90
      %p101 = scmp.eq.s32.totalorder %s20, 0
      %p102 = por %p100, %p101
      %p103 = scmp.ne.s32.totalorder %s89, %s90
      %p104 = scmp.eq.s32.totalorder %s21, 1
      %p105 = por %p103, %p104
      %p107 = scmp.ne.s32.totalorder %s90, %s106
      %p108 = scmp.eq.s32.totalorder %s21, 0
      %p109 = por %p107, %p108
      %p110 = scmp.le.s32.totalorder 1, %s15
      %p111 = scmp.lt.s32.totalorder %s15, 3
      %p112 = pnand %p110, %p111
      %p113 = pneg %p112
      // Predicated region
      $region9: #{tpu_custom_call.1} parent=5 // pred_check
        _
      $region10: #{tpu_custom_call.1} parent=5 // pred_check_branch
        %115 = sbr.rel (%p112) target = $region12
      $region11: #{tpu_custom_call.1} parent=5 // pred_region
        %s116 = ssub.s32 %s15, 1
        // Predicated region
        $region13: #{tpu_custom_call.1} parent=11 // pred_check
          %p117 = pneg %p48
        $region14: #{tpu_custom_call.1} parent=11 // pred_check_branch
          %119 = sbr.rel (%p117) target = $region16
        $region15: #{tpu_custom_call.1} parent=11 // pred_region
          %121 = vsyncadd [#allocation5], 0
          %s123 = sshll.u32 %s0, 4
          %s124 = int_to_ptr.hbm [resolvable:$true] %s123
          %126 = dma.hbm_to_smem %s124, 32, [#allocation2], [#allocation5]
        $region16: #{tpu_custom_call.1} parent=11 // pred_fallthru
          _
      $region12: #{tpu_custom_call.1} parent=5 // pred_fallthru
        _
      %p127 = scmp.lt.s32.totalorder %s15, 2
      // Predicated region
      $region17: #{tpu_custom_call.1} parent=5 // pred_check
        %p128 = pneg %p127
      $region18: #{tpu_custom_call.1} parent=5 // pred_check_branch
        %130 = sbr.rel (%p128) target = $region20
      $region19: #{tpu_custom_call.1} parent=5 // pred_region
        // Predicated region
        $region21: #{tpu_custom_call.1} parent=19 // pred_check
          %p131 = pneg %p68
        $region22: #{tpu_custom_call.1} parent=19 // pred_check_branch
          %133 = sbr.rel (%p131) target = $region24
        $region23: #{tpu_custom_call.1} parent=19 // pred_region
          %s134 = sand.u32 %s58, 1
          %s135 = scalar_lea.sflag [#allocation3], %s134
          %s136 = sand.u32 %s58, 1
          %s137 = smul.addr %s136, 16
          %s138 = scalar_lea.vmem [#allocation6], %s137
          %140 = vsyncadd %s135, 0
          %s141 = smul.addr %s22, 2
          %s142 = smul.addr %s141, 8
          %s143 = scalar_lea.hbm %s1, %s142
          %s144 = sshll.u32 %s143, 4
          %s145 = int_to_ptr.hbm [resolvable:$true] %s144
          %s146 = sshll.u32 %s138, 4
          %s147 = int_to_ptr.vmem [resolvable:$true] %s146
          %152 = dma.hbm_to_vmem [thread:$0]  %s145, 256, %s147, %s135, 128, 128, 8
        $region24: #{tpu_custom_call.1} parent=19 // pred_fallthru
          _
      $region20: #{tpu_custom_call.1} parent=5 // pred_fallthru
        _
      %p153 = scmp.le.s32.totalorder 1, %s15
      %p154 = scmp.lt.s32.totalorder %s15, 3
      %p155 = pnand %p153, %p154
      %p156 = pneg %p155
      // Predicated region
      $region25: #{tpu_custom_call.1} parent=5 // pred_check
        _
      $region26: #{tpu_custom_call.1} parent=5 // pred_check_branch
        %158 = sbr.rel (%p155) target = $region28
      $region27: #{tpu_custom_call.1} parent=5 // pred_region
        %s159 = ssub.s32 %s15, 1
        // Predicated region
        $region29: #{tpu_custom_call.1} parent=27 // pred_check
          %p160 = pneg %p48
        $region30: #{tpu_custom_call.1} parent=27 // pred_check_branch
          %162 = sbr.rel (%p160) target = $region32
        $region31: #{tpu_custom_call.1} parent=27 // pred_region
          %164 = dma.done [#allocation5], 32
        $region32: #{tpu_custom_call.1} parent=27 // pred_fallthru
          _
        %s165 = sand.u32 %s61, 1
        %s166 = scalar_lea.sflag [#allocation3], %s165
        %s167 = sand.u32 %s61, 1
        %s168 = smul.addr %s167, 16
        %s169 = scalar_lea.vmem [#allocation6], %s168
        // Predicated region
        $region33: #{tpu_custom_call.1} parent=27 // pred_check
          %p170 = pneg %p74
        $region34: #{tpu_custom_call.1} parent=27 // pred_check_branch
          %172 = sbr.rel (%p170) target = $region36
        $region35: #{tpu_custom_call.1} parent=27 // pred_region
          %174 = dma.done %s166, 256
        $region36: #{tpu_custom_call.1} parent=27 // pred_fallthru
          _
        %175 = sfence
        %p176 = pneg %p48
        %p177 = pneg %p45
        %s178 = sand.u32 %s61, 1
        %s179 = scalar_lea.sflag [#allocation3], %s178
        %s180 = sand.u32 %s61, 1
        %s181 = smul.addr %s180, 16
        %s182 = scalar_lea.vmem [#allocation6], %s181
        %p183 = pneg %p74
        %p184 = pneg %p71
        %p185 = pneg %p102
        %p186 = pneg %p99
        %s187 = sand.u32 %s89, 1
        %s188 = scalar_lea.sflag [#allocation4], %s187
        %s189 = sand.u32 %s89, 1
        %s190 = smul.addr %s189, 2
        %s191 = scalar_lea.vmem [#allocation7], %s190
        %s192 = smul.u32 2, %s25
        %v193 = vlaneseq
        %v194 = vand.u32 %v193, 127
        %v195 = vadd.s32 %v194, 128
        %s196 = smul.u32 %s25, 256
        %v197 = vstv %s196
        %v198 = vadd.s32 %v194, %v197
        %v199 = vadd.s32 %v195, %v197
        %v200 = vand.u32 %v198, 15
        %v201 = vand.u32 %v199, 15
        %v202 = vcvt.s32.f32 %v200
        %v203 = vcvt.s32.f32 %v201
        %v204 = vshra.s32 %v198, 4
        %v205 = vshra.s32 %v199, 4
        %v206 = vcvt.s32.f32 %v204
        %v207 = vcvt.s32.f32 %v205
        %s208 = smul.u32 %s24, 128
        %s209 = sld [smem:[#allocation2 + %s208]]
        %s210 = sadd.s32 %s208, 1
        %s211 = sld [smem:[#allocation2 + %s210]]
        %s212 = sadd.s32 %s208, 2
        %s213 = sld [smem:[#allocation2 + %s212]]
        %s214 = sadd.s32 %s208, 3
        %s215 = sld [smem:[#allocation2 + %s214]]
        %s216 = sadd.s32 %s208, 4
        %s217 = sld [smem:[#allocation2 + %s216]]
        %s218 = sadd.s32 %s208, 5
        %s219 = sld [smem:[#allocation2 + %s218]]
        %v220 = vstv %s209
        %v221 = vmul.f32 %v220, %v202
        %v222 = vmul.f32 %v220, %v203
        %v223 = vstv %s211
        %v224 = vmul.f32 %v223, %v206
        %v225 = vmul.f32 %v223, %v207
        %v226 = vadd.f32 %v221, %v224
        %v227 = vadd.f32 %v222, %v225
        %v228 = vstv %s213
        %v229 = vadd.f32 %v226, %v228
        %v230 = vadd.f32 %v227, %v228
        %v231 = vstv %s215
        %v232 = vmul.f32 %v231, %v202
        %v233 = vmul.f32 %v231, %v203
        %v234 = vstv %s217
        %v235 = vmul.f32 %v234, %v206
        %v236 = vmul.f32 %v234, %v207
        %v237 = vadd.f32 %v232, %v235
        %v238 = vadd.f32 %v233, %v236
        %v239 = vstv %s219
        %v240 = vadd.f32 %v237, %v239
        %v241 = vadd.f32 %v238, %v239
        %v242 = vfloor.f32 %v229
        %v243 = vfloor.f32 %v230
        %v244 = vfloor.f32 %v240
        %v245 = vfloor.f32 %v241
        %v246 = vsub.f32 %v229, %v242
        %v247 = vsub.f32 %v230, %v243
        %v248 = vsub.f32 %v240, %v244
        %v249 = vsub.f32 %v241, %v245
        %v250 = vcvt.f32.s32.to.zero.pseudo %v242
        %v251 = vcvt.f32.s32.to.zero.pseudo %v243
        %v252 = vcvt.f32.s32.to.zero.pseudo %v244
        %v253 = vcvt.f32.s32.to.zero.pseudo %v245
        %v254 = vlaneseq
        %v255 = vshrl.u32 %v254, 7
        %v256 = vadd.s32 %v255, 8
        %vm257 = vcmp.eq.s32.totalorder %v255, %v250
        %vm258 = vcmp.eq.s32.totalorder %v255, %v251
        %vm259 = vcmp.eq.s32.totalorder %v256, %v250
        %vm260 = vcmp.eq.s32.totalorder %v256, %v251
        %v261 = vsub.f32 1.0, %v246
        %v262 = vsub.f32 1.0, %v247
        %v263 = vadd.s32 %v250, 1
        %v264 = vadd.s32 %v251, 1
        %vm265 = vcmp.eq.s32.totalorder %v255, %v263
        %vm266 = vcmp.eq.s32.totalorder %v255, %v264
        %vm267 = vcmp.eq.s32.totalorder %v256, %v263
        %vm268 = vcmp.eq.s32.totalorder %v256, %v264
        %v269 = vsel %vm265, %v246, 0.0
        %v270 = vsel %vm266, %v247, 0.0
        %v271 = vsel %vm267, %v246, 0.0
        %v272 = vsel %vm268, %v247, 0.0
        %v273 = vsel %vm257, %v261, %v269
        %v274 = vsel %vm258, %v262, %v270
        %v275 = vsel %vm259, %v261, %v271
        %v276 = vsel %vm260, %v262, %v272
        %vm277 = vcmp.eq.s32.totalorder %v255, %v252
        %vm278 = vcmp.eq.s32.totalorder %v255, %v253
        %vm279 = vcmp.eq.s32.totalorder %v256, %v252
        %vm280 = vcmp.eq.s32.totalorder %v256, %v253
        %v281 = vsub.f32 1.0, %v248
        %v282 = vsub.f32 1.0, %v249
        %v283 = vadd.s32 %v252, 1
        %v284 = vadd.s32 %v253, 1
        %vm285 = vcmp.eq.s32.totalorder %v255, %v283
        %vm286 = vcmp.eq.s32.totalorder %v255, %v284
        %vm287 = vcmp.eq.s32.totalorder %v256, %v283
        %vm288 = vcmp.eq.s32.totalorder %v256, %v284
        %v289 = vsel %vm285, %v248, 0.0
        %v290 = vsel %vm286, %v249, 0.0
        %v291 = vsel %vm287, %v248, 0.0
        %v292 = vsel %vm288, %v249, 0.0
        %v293 = vsel %vm277, %v281, %v289
        %v294 = vsel %vm278, %v282, %v290
        %v295 = vsel %vm279, %v281, %v291
        %v296 = vsel %vm280, %v282, %v292
        %v297 = vld [vmem:[%s169] sm:$0xff]
        %v298 = vld [vmem:[%s169 + $0x8] sm:$0xff]
        %vm299 = vcmask 130048
        %v301 = vsel %vm299, %v297, 0
        %v304 = vsel %vm299, %v298, 0
        %306 = vmatpush.msra.mxu0 0.0
        %307 = vmatpush.msra.mxu0 0.0
        %308 = vmatpush.msra.mxu0 0.0
        %309 = vmatpush.msra.mxu0 0.0
        %310 = vmatpush.msra.mxu0 0.0
        %311 = vmatpush.msra.mxu0 0.0
        %312 = vmatpush.msra.mxu0 0.0
        %313 = vmatpush.msra.mxu0 0.0
        %314 = vmatpush.msra.mxu0 0.0
        %315 = vmatpush.msra.mxu0 0.0
        %316 = vmatpush.msra.mxu0 0.0
        %317 = vmatpush.msra.mxu0 0.0
        %318 = vmatpush.msra.mxu0 0.0
        %319 = vmatpush.msra.mxu0 0.0
        %320 = vmatpush.msra.mxu0 %v275
        %321 = vmatpush.msra.mxu0 %v273
        %322 = vmatmul.f32.gmra.mxu0 %v301
        %v323 = vpop.f32.mrf.mxu0
        %v324 = vadd.f32 0.0, %v323
        %325 = vmatmul.f32.gmra.mxu0 %v304
        %v326 = vpop.f32.mrf.mxu0
        %v327 = vadd.f32 0.0, %v326
        %328 = vdwg.mxu0
        %329 = vmatpush.msra.mxu0 0.0
        %330 = vmatpush.msra.mxu0 0.0
        %331 = vmatpush.msra.mxu0 0.0
        %332 = vmatpush.msra.mxu0 0.0
        %333 = vmatpush.msra.mxu0 0.0
        %334 = vmatpush.msra.mxu0 0.0
        %335 = vmatpush.msra.mxu0 0.0
        %336 = vmatpush.msra.mxu0 0.0
        %337 = vmatpush.msra.mxu0 0.0
        %338 = vmatpush.msra.mxu0 0.0
        %339 = vmatpush.msra.mxu0 0.0
        %340 = vmatpush.msra.mxu0 0.0
        %341 = vmatpush.msra.mxu0 0.0
        %342 = vmatpush.msra.mxu0 0.0
        %343 = vmatpush.msra.mxu0 %v276
        %344 = vmatpush.msra.mxu0 %v274
        %345 = vmatmul.f32.gmra.mxu0 %v301
        %v346 = vpop.f32.mrf.mxu0
        %v347 = vadd.f32 0.0, %v346
        %348 = vmatmul.f32.gmra.mxu0 %v304
        %v349 = vpop.f32.mrf.mxu0
        %v350 = vadd.f32 0.0, %v349
        %351 = vdwg.mxu0
        %v352 = vmul.f32 %v293, %v324
        %v353 = vmul.f32 %v294, %v347
        %v354 = vmul.f32 %v295, %v327
        %v355 = vmul.f32 %v296, %v350
        %v356 = vadd.f32 %v352, %v354
        %v357 = vrot.slane %v356, 4
        %v358 = vadd.f32 %v356, %v357
        %v359 = vrot.slane %v358, 2
        %v360 = vadd.f32 %v358, %v359
        %v361 = vrot.slane %v360, 1
        %v362 = vadd.f32 %v360, %v361
        %v363 = vadd.f32 %v353, %v355
        %v364 = vrot.slane %v363, 4
        %v365 = vadd.f32 %v363, %v364
        %v366 = vrot.slane %v365, 2
        %v367 = vadd.f32 %v365, %v366
        %v368 = vrot.slane %v367, 1
        %v369 = vadd.f32 %v367, %v368
        %v370 = vmul.f32 %v362, 2.0
        %v371 = vmul.f32 %v369, 2.0
        %v372 = vsub.f32 %v370, 1.0
        %v373 = vsub.f32 %v371, 1.0
        %v374 = vadd.f32 %v372, 0.2
        %v375 = vadd.f32 %v373, 0.2
        %v376 = vrcp.pop 0.05
        %v377 = vmul.f32 0.05, %v376
        %v378 = vsub.f32 1.0, %v377
        %v379 = vmul.f32 %v376, %v378
        %v380 = vadd.f32 %v376, %v379
        %vm381 = vweird.f32 %v376
        %v382 = vsel %vm381, %v376, %v380
        %v383 = vmul.f32 %v374, %v382
        %v384 = vmul.f32 %v375, %v382
        %v385 = vsub.f32 0.0, %v383
        %v386 = vsub.f32 0.0, %v384
        %v387 = vmul.f32 %v385, 1.442695
        %v388 = vpow.pop %v387
        %v389 = vmul.f32 %v386, 1.442695
        %v390 = vpow.pop %v389
        %v391 = vadd.f32 %v388, 1.0
        %v392 = vadd.f32 %v390, 1.0
        %v393 = vrcp.pop %v391
        %v394 = vmul.f32 %v391, %v393
        %v395 = vsub.f32 1.0, %v394
        %v396 = vmul.f32 %v393, %v395
        %v397 = vadd.f32 %v393, %v396
        %vm398 = vweird.f32 %v391
        %vm399 = vweird.f32 %v393
        %vm400 = vmor %vm398, %vm399
        %v401 = vsel %vm400, %v393, %v397
        %v402 = vand.u32 2147483647, %v391
        %vm403 = vcmp.eq.f32.partialorder %v402, 8.507059e+37
        %v404 = vand.u32 %v391, 2147483648
        %v405 = vor.u32 1.1754944e-38, %v404
        %v406 = vsel %vm403, %v405, %v401
        %v407 = vmul.f32 1.0, %v406
        %v408 = vrcp.pop %v392
        %v409 = vmul.f32 %v392, %v408
        %v410 = vsub.f32 1.0, %v409
        %v411 = vmul.f32 %v408, %v410
        %v412 = vadd.f32 %v408, %v411
        %vm413 = vweird.f32 %v392
        %vm414 = vweird.f32 %v408
        %vm415 = vmor %vm413, %vm414
        %v416 = vsel %vm415, %v408, %v412
        %v417 = vand.u32 2147483647, %v392
        %vm418 = vcmp.eq.f32.partialorder %v417, 8.507059e+37
        %v419 = vand.u32 %v392, 2147483648
        %v420 = vor.u32 1.1754944e-38, %v419
        %v421 = vsel %vm418, %v420, %v416
        %v422 = vmul.f32 1.0, %v421
        %v425 = vrot.slane %v422, 7
        %vm426 = vcmask 1040384
        %v427 = vsel %vm426, %v407, %v425
        %v429 = vlaneseq
        %vm430 = vcmp.ge.s32.totalorder %v429, 0
        %vm431 = vcmp.lt.s32.totalorder %v429, 256
        %vm432 = vmand %vm430, %vm431
        %433 = vst.msk [vmem:[%s191] sm:$0x3] %vm432, %v427
        %s434 = sand.u32 %s89, 1
        %s435 = scalar_lea.sflag [#allocation4], %s434
        %s436 = sand.u32 %s89, 1
        %s437 = smul.addr %s436, 2
        %s438 = scalar_lea.vmem [#allocation7], %s437
        // Predicated region
        $region37: #{tpu_custom_call.1} parent=27 // pred_check
          %p439 = pneg %p99
        $region38: #{tpu_custom_call.1} parent=27 // pred_check_branch
          %441 = sbr.rel (%p439) target = $region40
        $region39: #{tpu_custom_call.1} parent=27 // pred_region
          %s442 = smul.u32 2, %s25
          %444 = vsyncadd %s435, 0
          %s445 = smul.addr %s24, 2
          %s446 = sadd.s32 %s442, %s445
          %s447 = scalar_lea.hbm %s2, %s446
          %s449 = sshll.u32 %s438, 4
          %s450 = int_to_ptr.vmem [resolvable:$true] %s449
          %s451 = sshll.u32 %s447, 4
          %s452 = int_to_ptr.hbm [resolvable:$true] %s451
          %454 = dma.vmem_to_hbm [thread:$0]  %s450, 32, %s452, %s435
        $region40: #{tpu_custom_call.1} parent=27 // pred_fallthru
          _
      $region28: #{tpu_custom_call.1} parent=5 // pred_fallthru
        _
      %p455 = scmp.le.s32.totalorder 2, %s15
      // Predicated region
      $region41: #{tpu_custom_call.1} parent=5 // pred_check
        %p456 = pneg %p455
      $region42: #{tpu_custom_call.1} parent=5 // pred_check_branch
        %458 = sbr.rel (%p456) target = $region44
      $region43: #{tpu_custom_call.1} parent=5 // pred_region
        %s459 = ssub.s32 %s15, 2
        // Predicated region
        $region45: #{tpu_custom_call.1} parent=43 // pred_check
          %p460 = pneg %p105
        $region46: #{tpu_custom_call.1} parent=43 // pred_check_branch
          %462 = sbr.rel (%p460) target = $region48
        $region47: #{tpu_custom_call.1} parent=43 // pred_region
          %s463 = sand.u32 %s90, 1
          %s464 = scalar_lea.sflag [#allocation4], %s463
          %s465 = sand.u32 %s90, 1
          %s466 = smul.addr %s465, 2
          %s467 = scalar_lea.vmem [#allocation7], %s466
          %469 = dma.done %s464, 32
        $region48: #{tpu_custom_call.1} parent=43 // pred_fallthru
          _
      $region44: #{tpu_custom_call.1} parent=5 // pred_fallthru
        _
    $region6: #{tpu_custom_call.1} parent=1 // loop_footer
      %s19 = sadd.s32 1, %s15
    $region7: #{tpu_custom_call.1} parent=1 // loop_footer_branch
      %14 = sbr.rel target = $region3
    $region8: #{tpu_custom_call.1} parent=1 // loop_exit
      _
    %470 = vsyncpa [#allocation3], 1
    %s471 = scalar_lea.sflag [#allocation3], 1
    %472 = vsyncpa %s471, 1
    %473 = vsyncpa [#allocation4], 1
    %s474 = scalar_lea.sflag [#allocation4], 1
    %475 = vsyncpa %s474, 1
    %476 = vsyncpa [#allocation5], 1
    %s477 = scalar_lea.sflag [#allocation5], 1
    %478 = vsyncpa %s477, 1

</llo_original>
